<compile_context>
chip_gen: v7x
topology: tpu7x:2x2x1
jax: 0.10.0
libtpu: 0.0.40
codegen_flags: <defaults>
</compile_context>

<pallas_src>
import functools

import jax
import jax.numpy as jnp
from jax.experimental import pallas as pl
from jax.experimental.pallas import tpu as pltpu

_NEG_BIG = -1e30            # mask for padded class columns (softmax/sigmoid safe)
_VMEM_CEILING_BYTES = 48 << 20   # safe on v5e/v6e (128 MiB) and v7x (64 MiB)


def _round_up(x, m):
    return (x + m - 1) // m * m


def _make_head_kernel(act_func):
    def head_kernel(x_ref, w_ref, b_ref, o_ref):
        # MXU matmul (bf16 operands when prepared that way), f32 accumulate.
        logits = jnp.dot(x_ref[...], w_ref[...],
                         preferred_element_type=jnp.float32)
        logits = logits + b_ref[...]          # bias is f32; padded cols = -1e30
        if act_func == "softmax":
            # Softmax over the class axis, all in f32 (v5e has no bf16 VPU/EUP).
            m = jnp.max(logits, axis=-1, keepdims=True)
            e = jnp.exp(logits - m)
            s = jnp.sum(e, axis=-1, keepdims=True)
            # Exact divide so rows sum to 1 to f32 precision (approx EUP
            # reciprocal is not worth the normalization error for this head).
            probs = e / s
        else:  # "sigmoid"
            # Padded columns carry bias -1e30 -> sigmoid ~ 0; they are sliced
            # off in the wrapper.  Keep jax.nn.sigmoid (numerically stable) —
            # a naive exp-based sigmoid would overflow in the padded lanes.
            probs = jax.nn.sigmoid(logits)
        o_ref[...] = probs.astype(o_ref.dtype)

    return head_kernel


def prepare_head_params(weight, bias, *, param_dtype=jnp.bfloat16,
                        k_align=128, n_align=128):
    """One-time conversion of PyTorch-layout parameters (do at load time).

    weight: (num_classes, dim_in), bias: (num_classes,)
      -> w_t: (Kp, Np) pre-transposed, zero-padded, cast to param_dtype
              (bf16 by default: MXU-native, half the VMEM/DMA footprint)
         b2 : (1, Np) float32, padded class columns masked with -1e30
    """
    num_classes, dim_in = weight.shape
    kp = _round_up(dim_in, k_align)
    np_ = _round_up(num_classes, n_align)
    w_t = jnp.zeros((kp, np_), param_dtype)
    w_t = w_t.at[:dim_in, :num_classes].set(weight.T.astype(param_dtype))
    b2 = jnp.full((1, np_), _NEG_BIG, dtype=jnp.float32)
    b2 = b2.at[0, :num_classes].set(bias.astype(jnp.float32))
    return w_t, b2


@functools.partial(jax.jit, static_argnames=("num_classes", "act_func",
                                             "batch_tile", "out_dtype"))
def transformer_basic_head(x, w_t, b2, *, num_classes, act_func="softmax",
                           batch_tile=None, out_dtype=None):
    """x: (B, dim_in); w_t/b2: outputs of prepare_head_params()."""
    if act_func not in ("softmax", "sigmoid"):
        raise NotImplementedError(
            f"{act_func} is not supported as an activation function.")

    B, dim_in = x.shape
    Kp, Np = w_t.shape
    assert Kp >= dim_in and Np >= num_classes

    compute_dtype = w_t.dtype
    if out_dtype is None:
        out_dtype = x.dtype
    x_itemsize = jnp.dtype(compute_dtype).itemsize
    out_itemsize = jnp.dtype(out_dtype).itemsize
    w_itemsize = jnp.dtype(w_t.dtype).itemsize
    b_itemsize = jnp.dtype(b2.dtype).itemsize

    # Honest VMEM accounting: Pallas double-buffers every pipelined input, so
    # the grid-invariant weight and bias are counted TWICE.
    resident = 2 * Kp * Np * w_itemsize + 2 * Np * b_itemsize
    ceiling = _VMEM_CEILING_BYTES
    if resident >= ceiling:
        # TODO(synk): class-axis (N) grid with a two-pass softmax for heads
        #             whose padded weight does not fit in VMEM.
        raise NotImplementedError(
            "Projection weight too large for VMEM-resident tiling; "
            "class-tiled fallback not implemented.")

    # Minimal batch padding: sublane alignment only (not a multiple of TB).
    Bp = _round_up(B, 8)

    if batch_tile is None:
        budget = ceiling - resident
        # Double-buffered streamed tiles: x tile in + output tile out.
        per_row = 2 * Kp * x_itemsize + 2 * Np * out_itemsize
        tb = int(budget // max(per_row, 1))
        tb = max(8, (min(512, tb) // 8) * 8)
        # TODO(synk): if VMEM ever forces tb below 128 with a large batch,
        #             switch to class-tiling instead of starving the MXU M dim.
        tb = min(tb, Bp)
        # v7x megacore: keep at least 2 grid steps when the batch can be split,
        # so the "parallel" axis actually feeds both TensorCores.
        if Bp >= 256 and tb > pl.cdiv(Bp, 2):
            tb = _round_up(pl.cdiv(Bp, 2), 8)
        batch_tile = tb
    TB = int(batch_tile)
    assert TB % 8 == 0 and TB >= 8

    # Cast (to the MXU compute dtype) and pad x only when actually needed.
    x_c = x if x.dtype == compute_dtype else x.astype(compute_dtype)
    if (B, dim_in) != (Bp, Kp):
        # Padded K columns multiply zero weight rows, padded batch rows are
        # sliced off below, so zero-fill values never leak into real outputs.
        x_in = jnp.zeros((Bp, Kp), compute_dtype).at[:B, :dim_in].set(x_c)
    else:
        x_in = x_c

    streamed = 2 * TB * Kp * x_itemsize + 2 * TB * Np * out_itemsize
    vmem_limit = int(min(ceiling,
                         max(resident + streamed + (4 << 20), 32 << 20)))

    grid = (pl.cdiv(Bp, TB),)   # last tile may be partial; Pallas clips stores

    out = pl.pallas_call(
        _make_head_kernel(act_func),
        out_shape=jax.ShapeDtypeStruct((Bp, Np), out_dtype),
        grid_spec=pltpu.PrefetchScalarGridSpec(
            num_scalar_prefetch=0,
            grid=grid,
            in_specs=[
                pl.BlockSpec((TB, Kp), lambda i: (i, 0)),   # x: streamed tiles
                pl.BlockSpec((Kp, Np), lambda i: (0, 0)),   # W: grid-invariant
                pl.BlockSpec((1, Np), lambda i: (0, 0)),    # bias: grid-invariant
            ],
            out_specs=pl.BlockSpec((TB, Np), lambda i: (i, 0)),  # lane-dense store
        ),
        compiler_params=pltpu.CompilerParams(
            dimension_semantics=("parallel",),
            vmem_limit_bytes=vmem_limit),
    )(x_in, w_t, b2)

    # Strip batch-alignment and class padding.
    return out[:B, :num_classes]


def _reference_logits(x, weight, bias):
    return x @ weight.T + bias


if __name__ == "__main__":
    key = jax.random.PRNGKey(0)
    k_x, k_w, k_b = jax.random.split(key, 3)

    B, dim_in, num_classes = 8, 32, 16

    x = jax.random.normal(k_x, (B, dim_in), dtype=jnp.float32)
    # Deterministic "nn.Linear"-style init (uniform in +/- 1/sqrt(dim_in)).
    bound = 1.0 / jnp.sqrt(dim_in)
    weight = jax.random.uniform(k_w, (num_classes, dim_in),
                                minval=-bound, maxval=bound, dtype=jnp.float32)
    bias = jax.random.uniform(k_b, (num_classes,),
                              minval=-bound, maxval=bound, dtype=jnp.float32)

    logits_ref = _reference_logits(x, weight, bias)
    ref_softmax = jax.nn.softmax(logits_ref, axis=1)
    ref_sigmoid = jax.nn.sigmoid(logits_ref)

    # ---- Production path: bf16 weights (MXU-native), f32 softmax math. ----
    w_bf16, b2 = prepare_head_params(weight, bias)           # one-time prep
    out = transformer_basic_head(x, w_bf16, b2, num_classes=num_classes)
    out = jax.block_until_ready(out)
    assert out.shape == (B, num_classes)
    assert out.dtype == x.dtype
    # bf16 matmul operands -> loose tolerance vs the f32 reference ...
    assert jnp.allclose(out, ref_softmax, atol=3e-2, rtol=3e-2)
    # ... but normalization is exact (f32 softmax with an exact divide).
    assert jnp.allclose(jnp.sum(out, axis=1), 1.0, atol=1e-4)

    # ---- f32-parameter path: tighter numerical check of the same kernel. ----
    w_f32, b2_f32 = prepare_head_params(weight, bias, param_dtype=jnp.float32)
    out32 = transformer_basic_head(x, w_f32, b2_f32, num_classes=num_classes)
    out32 = jax.block_until_ready(out32)
    assert jnp.allclose(out32, ref_softmax, atol=1e-2, rtol=1e-2)
    assert jnp.allclose(jnp.sum(out32, axis=1), 1.0, atol=1e-4)

    # ---- Sigmoid activation branch. ----
    out_sig = transformer_basic_head(x, w_f32, b2_f32, num_classes=num_classes,
                                     act_func="sigmoid")
    out_sig = jax.block_until_ready(out_sig)
    assert out_sig.shape == (B, num_classes)
    assert jnp.allclose(out_sig, ref_sigmoid, atol=1e-2, rtol=1e-2)

    print("KERNEL_OK")
</pallas_src>

<mosaic_0001>
module attributes {stable_mosaic.version = 11 : i64} {
  func.func @head_kernel(%arg0: i32, %arg1: memref<8x128xbf16, #tpu.memory_space<vmem>>, %arg2: memref<128x128xbf16, #tpu.memory_space<vmem>>, %arg3: memref<1x128xf32, #tpu.memory_space<vmem>>, %arg4: memref<8x128xf32, #tpu.memory_space<vmem>>) attributes {dimension_semantics = [#tpu.dimension_semantics<parallel>], iteration_bounds = array<i64: 1>, scalar_prefetch = 0 : i64, scratch_operands = 0 : i64, tpu.core_type = #tpu.core_type<tc>, window_params = [{transform_indices = @transform_0, window_bounds = array<i64: 8, 128>}, {pipeline_mode = #tpu.pipeline_mode<synchronous>, transform_indices = @transform_1, window_bounds = array<i64: 128, 128>}, {pipeline_mode = #tpu.pipeline_mode<synchronous>, transform_indices = @transform_2, window_bounds = array<i64: 1, 128>}, {transform_indices = @transform_3, window_bounds = array<i64: 8, 128>}]} {
    %c0 = arith.constant 0 : index
    %c0_0 = arith.constant 0 : index
    %0 = vector.load %arg1[%c0, %c0_0] : memref<8x128xbf16, #tpu.memory_space<vmem>>, vector<8x128xbf16>
    %c0_1 = arith.constant 0 : index
    %c0_2 = arith.constant 0 : index
    %1 = vector.load %arg2[%c0_1, %c0_2] : memref<128x128xbf16, #tpu.memory_space<vmem>>, vector<128x128xbf16>
    %cst = arith.constant dense<0.000000e+00> : vector<8x128xf32>
    %2 = tpu.matmul %0, %1, %cst {dimension_numbers = #tpu.dot_dimension_numbers<[1], [0], [0], [1], [0, 0, 1, 1], [], []>} : vector<8x128xbf16>, vector<128x128xbf16>, vector<8x128xf32> -> vector<8x128xf32>
    %c0_3 = arith.constant 0 : index
    %c0_4 = arith.constant 0 : index
    %3 = vector.load %arg3[%c0_3, %c0_4] : memref<1x128xf32, #tpu.memory_space<vmem>>, vector<1x128xf32>
    %4 = vector.broadcast %3 : vector<1x128xf32> to vector<8x128xf32>
    %5 = arith.addf %2, %4 : vector<8x128xf32>
    %cst_5 = arith.constant dense<0xFF800000> : vector<8xf32>
    %6 = vector.multi_reduction <maximumf>, %5, %cst_5 [1] : vector<8x128xf32> to vector<8xf32>
    %7 = vector.shape_cast %6 : vector<8xf32> to vector<8x1xf32>
    %8 = vector.broadcast %7 : vector<8x1xf32> to vector<8x128xf32>
    %9 = arith.subf %5, %8 : vector<8x128xf32>
    %10 = math.exp %9 : vector<8x128xf32>
    %cst_6 = arith.constant dense<0.000000e+00> : vector<8xf32>
    %11 = vector.multi_reduction <add>, %10, %cst_6 [1] : vector<8x128xf32> to vector<8xf32>
    %12 = vector.shape_cast %11 : vector<8xf32> to vector<8x1xf32>
    %13 = vector.broadcast %12 : vector<8x1xf32> to vector<8x128xf32>
    %14 = arith.divf %10, %13 : vector<8x128xf32>
    %c0_7 = arith.constant 0 : index
    %c0_8 = arith.constant 0 : index
    %15 = vector.load %arg4[%c0_7, %c0_8] : memref<8x128xf32, #tpu.memory_space<vmem>>, vector<8x128xf32>
    tpu.vector_store %arg4[%c0_7, %c0_8], %14 {strides = array<i32>} : memref<8x128xf32, #tpu.memory_space<vmem>>, vector<8x128xf32>,
    return
  }
  func.func @transform_0(%arg0: i32) -> (i32, i32) {
    %c0_i32 = arith.constant 0 : i32
    %c0_i32_0 = arith.constant 0 : i32
    return %arg0, %c0_i32 : i32, i32
  }
  func.func @transform_1(%arg0: i32) -> (i32, i32) {
    %c0_i32 = arith.constant 0 : i32
    %c0_i32_0 = arith.constant 0 : i32
    %c0_i32_1 = arith.constant 0 : i32
    return %c0_i32, %c0_i32_0 : i32, i32
  }
  func.func @transform_2(%arg0: i32) -> (i32, i32) {
    %c0_i32 = arith.constant 0 : i32
    %c0_i32_0 = arith.constant 0 : i32
    %c0_i32_1 = arith.constant 0 : i32
    return %c0_i32, %c0_i32_0 : i32, i32
  }
  func.func @transform_3(%arg0: i32) -> (i32, i32) {
    %c0_i32 = arith.constant 0 : i32
    %c0_i32_0 = arith.constant 0 : i32
    return %arg0, %c0_i32 : i32, i32
  }
}

</mosaic_0001>

<llo_original>
// kernel: transformer_basic_head.1
$region0: #{transformer_basic_head.1}
  #allocation0 [shape = 'u32[]', space=smem, size = 0x4, offset = 0x4, fixed_abs, tag = 'smem constant byte address 0x4 - core index']
  #allocation1 [shape = 'u32[144,128]{1,0:T(1,128)}', space=vmem, size = 0x12000, scoped, tag = 'internal scratch']
  %s0 = inlined_call_operand.vmem [shape: bf16[8,128], index: 0, kind: input, shape index: {}]
  %s1 = inlined_call_operand.hbm [shape: bf16[128,128], index: 1, kind: input, shape index: {}]
  %s2 = inlined_call_operand.vmem [shape: f32[1,128], index: 2, kind: input, shape index: {}]
  %s3 = inlined_call_operand.hbm [shape: f32[8,128], index: 3, kind: output, shape index: {}]
  %s4 = sld [smem:[#allocation0]]
  $region26: #{transformer_basic_head.1} parent=0
    _
  %s6 = ssub.s32 1, %s4
  %s7 = scalar_select 0, %s6, %s4
  $region1: #{transformer_basic_head.1} parent=0
    #allocation2 [shape = 'u8[32768]{0}', space=vmem, size = 0x8000, scoped, tag = 'input window, operand 1, single buffered']
    #allocation3 [shape = 's32[1]{0}', space=sflag, size = 0x4, scoped, tag = 'scoped memory for transformer_basic_head.1']
    #allocation4 [shape = 's32[1]{0}', space=sflag, size = 0x4, scoped, tag = 'scoped memory for transformer_basic_head.1']
    #allocation5 [shape = 'u8[4096]{0}', space=vmem, size = 0x1000, scoped, tag = 'output window, operand 0, single buffered']
    %8 = vsyncpa [#allocation3], 0
    %9 = vsyncpa [#allocation4], 0
    // Predicated region
    $region2: #{transformer_basic_head.1} parent=1 // pred_check
      _
    $region3: #{transformer_basic_head.1} parent=1 // pred_check_branch
      %11 = sbr.rel (0) target = $region5
    $region4: #{transformer_basic_head.1} parent=1 // pred_region
      _
    $region5: #{transformer_basic_head.1} parent=1 // pred_fallthru
      _
    // Predicated region
    $region6: #{transformer_basic_head.1} parent=1 // pred_check
      _
    $region7: #{transformer_basic_head.1} parent=1 // pred_check_branch
      %13 = sbr.rel (0) target = $region9
    $region8: #{transformer_basic_head.1} parent=1 // pred_region
      %s15 = ssub.s32 1024, 1024
      %16 = vsyncadd [#allocation3], %s15
      %s17 = sshll.u32 [#allocation2], 4
      %s18 = int_to_ptr.vmem [resolvable:$true] %s17
      %23 = dma.hbm_to_vmem [thread:$0]  %s1, 1024, %s18, [#allocation3], 64, 64, 4
    $region9: #{transformer_basic_head.1} parent=1 // pred_fallthru
      _
    // Predicated region
    $region10: #{transformer_basic_head.1} parent=1 // pred_check
      _
    $region11: #{transformer_basic_head.1} parent=1 // pred_check_branch
      %25 = sbr.rel (0) target = $region13
    $region12: #{transformer_basic_head.1} parent=1 // pred_region
      _
    $region13: #{transformer_basic_head.1} parent=1 // pred_fallthru
      _
    // Predicated region
    $region14: #{transformer_basic_head.1} parent=1 // pred_check
      _
    $region15: #{transformer_basic_head.1} parent=1 // pred_check_branch
      %27 = sbr.rel (0) target = $region17
    $region16: #{transformer_basic_head.1} parent=1 // pred_region
      %28 = dma.done [#allocation3], 1024
    $region17: #{transformer_basic_head.1} parent=1 // pred_fallthru
      _
    %v30 = vld [vmem:[%s0] sm:$0xf]
    %v31 = vld [vmem:[#allocation2] sm:$0xf]
    %v32 = vld [vmem:[#allocation2 + $0x4] sm:$0xf]
    %v33 = vld [vmem:[#allocation2 + $0x8] sm:$0xf]
    %v34 = vld [vmem:[#allocation2 + $0xc] sm:$0xf]
    %v35 = vld [vmem:[#allocation2 + $0x10] sm:$0xf]
    %v36 = vld [vmem:[#allocation2 + $0x14] sm:$0xf]
    %v37 = vld [vmem:[#allocation2 + $0x18] sm:$0xf]
    %v38 = vld [vmem:[#allocation2 + $0x1c] sm:$0xf]
    %v39 = vld [vmem:[#allocation2 + $0x20] sm:$0xf]
    %v40 = vld [vmem:[#allocation2 + $0x24] sm:$0xf]
    %v41 = vld [vmem:[#allocation2 + $0x28] sm:$0xf]
    %v42 = vld [vmem:[#allocation2 + $0x2c] sm:$0xf]
    %v43 = vld [vmem:[#allocation2 + $0x30] sm:$0xf]
    %v44 = vld [vmem:[#allocation2 + $0x34] sm:$0xf]
    %v45 = vld [vmem:[#allocation2 + $0x38] sm:$0xf]
    %v46 = vld [vmem:[#allocation2 + $0x3c] sm:$0xf]
    %v47 = vld [vmem:[%s2] sm:$0x1]
    %v49 = vlaneseq
    %v50 = vshrl.u32 %v49, 7
    %v51 = vsub.s32 0, %v50
    %v52 = vrot.slane %v47, %v51
    %v70 = vunpack.c.l.b16 %v31
    %v71 = vunpack.c.l.b16 %v32
    %v72 = vunpack.c.l.b16 %v33
    %v73 = vunpack.c.l.b16 %v34
    %v74 = vunpack.c.l.b16 %v35
    %v75 = vunpack.c.l.b16 %v36
    %v76 = vunpack.c.l.b16 %v37
    %v77 = vunpack.c.l.b16 %v38
    %v78 = vunpack.c.l.b16 %v39
    %v79 = vunpack.c.l.b16 %v40
    %v80 = vunpack.c.l.b16 %v41
    %v81 = vunpack.c.l.b16 %v42
    %v82 = vunpack.c.l.b16 %v43
    %v83 = vunpack.c.l.b16 %v44
    %v84 = vunpack.c.l.b16 %v45
    %v85 = vunpack.c.l.b16 %v46
    %v86 = vpack.c.b16 %v71, %v70
    %v87 = vpack.c.b16 %v73, %v72
    %v88 = vpack.c.b16 %v75, %v74
    %v89 = vpack.c.b16 %v77, %v76
    %v90 = vpack.c.b16 %v79, %v78
    %v91 = vpack.c.b16 %v81, %v80
    %v92 = vpack.c.b16 %v83, %v82
    %v93 = vpack.c.b16 %v85, %v84
    %102 = vmatprep.subr.bf16.mxu0 0
    %103 = vmatpush1.bf16.msra.mxu0 %v86
    %104 = vmatprep.subr.bf16.mxu0 0
    %105 = vmatpush1.bf16.msra.mxu0 %v87
    %106 = vmatprep.subr.bf16.mxu0 0
    %107 = vmatpush1.bf16.msra.mxu0 %v88
    %108 = vmatprep.subr.bf16.mxu0 0
    %109 = vmatpush1.bf16.msra.mxu0 %v89
    %110 = vmatprep.subr.bf16.mxu0 0
    %111 = vmatpush1.bf16.msra.mxu0 %v90
    %112 = vmatprep.subr.bf16.mxu0 0
    %113 = vmatpush1.bf16.msra.mxu0 %v91
    %114 = vmatprep.subr.bf16.mxu0 0
    %115 = vmatpush1.bf16.msra.mxu0 %v92
    %116 = vmatprep.subr.bf16.mxu0 0
    %117 = vmatpush1.bf16.msra.mxu0 %v93
    %118 = vmatprep.subr.bf16.mxu0 0
    %119 = vmatpush1.bf16.msra.mxu0 0
    %120 = vmatprep.subr.bf16.mxu0 0
    %121 = vmatpush1.bf16.msra.mxu0 0
    %122 = vmatprep.subr.bf16.mxu0 0
    %123 = vmatpush1.bf16.msra.mxu0 0
    %124 = vmatprep.subr.bf16.mxu0 0
    %125 = vmatpush1.bf16.msra.mxu0 0
    %126 = vmatprep.subr.bf16.mxu0 0
    %127 = vmatpush1.bf16.msra.mxu0 0
    %128 = vmatprep.subr.bf16.mxu0 0
    %129 = vmatpush1.bf16.msra.mxu0 0
    %130 = vmatprep.subr.bf16.mxu0 0
    %131 = vmatpush1.bf16.msra.mxu0 0
    %132 = vmatprep.subr.bf16.mxu0 0
    %133 = vmatpush1.bf16.msra.mxu0 0
    %134 = vmatprep.mubr.bf16.mxu0 0
    %135 = vmatmul.mubr.bf16.gmra.mrb[0].mxu0 %v30
    %v136 = vpop.f32.mrb[0].mxu0
    %v137 = vadd.f32 %v52, %v136
    %v138 = vpop.f32.mrb[0].mxu0
    %v139 = vpop.f32.mrb[0].mxu0
    %v140 = vpop.f32.mrb[0].mxu0
    %141 = vdwg.mxu0
    %142 = vmax.xlane.f32.xlu0 %v137
    %v143 = vpop.xlane.xlu0 %142
    %v144 = vsub.f32 %v137, %v143
    %v145 = vmul.f32 %v144, 1.442695
    %v146 = vpow.pop %v145
    %147 = vadd.xlane.f32.xlu0 %v146
    %v148 = vpop.xlane.xlu0 %147
    %v149 = vrcp.pop %v148
    %v150 = vmul.f32 %v146, %v149
    %151 = vst [vmem:[#allocation5] sm:$0xff] %v150
    // Predicated region
    $region18: #{transformer_basic_head.1} parent=1 // pred_check
      _
    $region19: #{transformer_basic_head.1} parent=1 // pred_check_branch
      %153 = sbr.rel (0) target = $region21
    $region20: #{transformer_basic_head.1} parent=1 // pred_region
      %s155 = ssub.s32 128, 128
      %156 = vsyncadd [#allocation4], %s155
      %s158 = sshll.u32 [#allocation5], 4
      %s159 = int_to_ptr.vmem [resolvable:$true] %s158
      %161 = dma.vmem_to_hbm [thread:$0]  %s159, 128, %s3, [#allocation4]
    $region21: #{transformer_basic_head.1} parent=1 // pred_fallthru
      _
    // Predicated region
    $region22: #{transformer_basic_head.1} parent=1 // pred_check
      _
    $region23: #{transformer_basic_head.1} parent=1 // pred_check_branch
      %163 = sbr.rel (0) target = $region25
    $region24: #{transformer_basic_head.1} parent=1 // pred_region
      %164 = dma.done [#allocation4], 128
    $region25: #{transformer_basic_head.1} parent=1 // pred_fallthru
      _
    %165 = vsyncpa [#allocation3], 1
    %166 = vsyncpa [#allocation4], 1

</llo_original>
